<compile_context>
chip_gen: v7x
topology: tpu7x:2x2x1
jax: 0.10.0
libtpu: 0.0.40
codegen_flags: <defaults>
</compile_context>

<pallas_src>
import math

import jax
import jax.numpy as jnp
from jax.experimental import pallas as pl
from jax.experimental.pallas import tpu as pltpu

NUM_CLASSES = 10  # classes = [str(i) for i in range(10)]

_SUBLANES = 8
# (4096, 10) f32 block -> 2 MiB lane-padded VMEM buffer; x2 inputs x2 (double
# buffering) = 8 MiB, comfortably inside every generation's default scoped VMEM.
_DEFAULT_MAX_TILE_ROWS = 4096


def _cdiv(a, b):
    return -(-a // b)


def _round_up(a, m):
    return _cdiv(a, m) * m


def _make_kernel(tile_b, tiles_per_p, num_rows, need_mask):
    """Accumulates per-class column sums of (output - onehot)^2."""

    def kernel(x_ref, tgt_ref, acc_ref):
        t = pl.program_id(1)

        @pl.when(t == 0)
        def _init():
            acc_ref[...] = jnp.zeros_like(acc_ref)

        x = x_ref[...].astype(jnp.float32)                  # (tile_b, C) upcast in-register
        cls = jax.lax.broadcasted_iota(jnp.int32, x.shape, 1)
        # (output - onehot): subtract 1 only at the target class column.
        d = jnp.where(cls == tgt_ref[...], x - 1.0, x)
        if need_mask:
            # Zero out rows past the real batch (partial tail tile and any
            # clamped duplicate tile from the parallel split).
            p = pl.program_id(0)
            goff = (p * tiles_per_p + t) * tile_b
            row = jax.lax.broadcasted_iota(jnp.int32, x.shape, 0) + goff
            d = jnp.where(row < num_rows, d, 0.0)
        sq = d * d
        # Column-direction accumulation: vreg-wise VPU adds, one cross-sublane
        # reduce per tile (not one cross-lane XLU reduce per vreg row).
        acc_ref[0:1, :] += jnp.sum(sq, axis=0, keepdims=True)

    return kernel


def bbb_loss(output, target, kl, n_batches, batch_size, sigma_prior, beta,
             max_tile_rows=_DEFAULT_MAX_TILE_ROWS):
    """JAX/Pallas equivalent of Loss.forward."""
    del n_batches  # only used on the host to compute `beta` in the reference

    output = jnp.asarray(output)
    b, c = output.shape
    target2d = jnp.asarray(target).astype(jnp.int32).reshape(b, 1)

    # ---- tiling (all static) ---------------------------------------------
    if b <= max_tile_rows:
        tile_b, num_tiles = b, 1                     # full-array block, no mask
    else:
        nt = _cdiv(b, max_tile_rows)
        tile_b = _round_up(_cdiv(b, nt), _SUBLANES)  # balanced tiles, mult of 8
        num_tiles = _cdiv(b, tile_b)

    # Split the tile loop two ways once there is enough work: uses both
    # TensorCores on v7x; on 1-TC chips it is the same serial loop.
    p_split = 2 if num_tiles >= 8 else 1
    tiles_per_p = _cdiv(num_tiles, p_split)
    covered_tiles = p_split * tiles_per_p
    need_mask = covered_tiles * tile_b != b
    need_clamp = covered_tiles != num_tiles
    last_tile = num_tiles - 1

    if need_clamp:
        def row_map(p, t):
            return (jnp.minimum(p * tiles_per_p + t, last_tile), 0)
    else:
        def row_map(p, t):
            return (p * tiles_per_p + t, 0)

    kernel = _make_kernel(tile_b, tiles_per_p, b, need_mask)

    partials = pl.pallas_call(
        kernel,
        out_shape=jax.ShapeDtypeStruct((p_split * _SUBLANES, c), jnp.float32),
        grid_spec=pltpu.PrefetchScalarGridSpec(
            num_scalar_prefetch=0,
            grid=(p_split, tiles_per_p),
            in_specs=[
                pl.BlockSpec((tile_b, c), row_map),   # network output, native layout
                pl.BlockSpec((tile_b, 1), row_map),   # target class indices
            ],
            # Resident accumulator block per parallel shard.
            out_specs=pl.BlockSpec((_SUBLANES, c), lambda p, t: (p, 0)),
        ),
        compiler_params=pltpu.CompilerParams(
            dimension_semantics=("parallel", "arbitrary"),
            vmem_limit_bytes=32 * 1024 * 1024,
        ),
    )(output, target2d)

    # ---- tiny scalar epilogue (one fused XLA op) ---------------------------
    f32 = jnp.float32
    sigma = jnp.asarray(sigma_prior, f32)
    bs = jnp.asarray(batch_size, f32)
    s = jnp.sum(partials)                                  # sum((output - onehot)^2)
    log_const = f32(-0.5 * math.log(2.0 * math.pi)) - jnp.log(jnp.abs(sigma))
    l_likelihood = f32(b * c) * log_const - s / (2.0 * sigma * sigma)
    return (jnp.asarray(beta, f32) * jnp.asarray(kl, f32) - l_likelihood) / bs


# Host-side beta schedule, same as reference.
def beta_schedule(mode, batch_idx, n_batches):
    if mode == "Blundell":
        return 2 ** (n_batches - (batch_idx + 1)) / float(2 ** n_batches - 1)
    elif mode == "Soenderby":
        return min(batch_idx / (n_batches // 4), 1)
    else:
        return 1.0 / n_batches


if __name__ == "__main__":
    key = jax.random.PRNGKey(0)
    k_out, k_tgt, k_kl = jax.random.split(key, 3)

    def reference(out, tgt, kl_, bs, sigma, beta_):
        oh = jnp.eye(NUM_CLASSES, dtype=jnp.float32)[tgt]
        log_const = -0.5 * math.log(2.0 * math.pi) - math.log(abs(sigma))
        lg = log_const - (out.astype(jnp.float32) - oh) ** 2 / (2.0 * sigma ** 2)
        return (beta_ * kl_ - jnp.sum(lg)) / float(bs)

    n_batches = 16
    sigma_prior = 0.1
    kl = jnp.abs(jax.random.normal(k_kl, ())) * 10.0
    beta_val = beta_schedule("Blundell", batch_idx=0, n_batches=n_batches)

    # 1) Small batch: single full-array tile, no masking.
    b = 8
    out = jax.random.normal(k_out, (b, NUM_CLASSES), dtype=jnp.float32)
    tgt = jax.random.randint(k_tgt, (b,), 0, NUM_CLASSES)
    loss = bbb_loss(out, tgt, kl, n_batches, b, sigma_prior, beta_val)
    jax.block_until_ready(loss)
    ref = reference(out, tgt, kl, b, sigma_prior, beta_val)
    assert jnp.allclose(loss, ref, rtol=1e-4, atol=1e-4), (loss, ref)

    # 2) Multi-tile resident-accumulator path (5 tiles of 40 rows, no mask).
    b = 200
    out2 = jax.random.normal(k_out, (b, NUM_CLASSES), dtype=jnp.float32)
    tgt2 = jax.random.randint(k_tgt, (b,), 0, NUM_CLASSES)
    loss2 = bbb_loss(out2, tgt2, kl, n_batches, b, sigma_prior, beta_val,
                     max_tile_rows=48)
    jax.block_until_ready(loss2)
    ref2 = reference(out2, tgt2, kl, b, sigma_prior, beta_val)
    assert jnp.allclose(loss2, ref2, rtol=1e-4, atol=1e-4), (loss2, ref2)

    # 3) Parallel two-way split + tail masking + clamped duplicate tile
    #    (900 rows, 64-row tiles -> 15 tiles -> grid (2, 8)).
    b = 900
    out3 = jax.random.normal(k_out, (b, NUM_CLASSES), dtype=jnp.float32)
    tgt3 = jax.random.randint(k_tgt, (b,), 0, NUM_CLASSES)
    loss3 = bbb_loss(out3, tgt3, kl, n_batches, b, sigma_prior, beta_val,
                     max_tile_rows=64)
    jax.block_until_ready(loss3)
    ref3 = reference(out3, tgt3, kl, b, sigma_prior, beta_val)
    assert jnp.allclose(loss3, ref3, rtol=1e-4, atol=1e-4), (loss3, ref3)

    # 4) bf16 activations: upcast happens in-register inside the kernel.
    b = 8
    out4 = jax.random.normal(k_out, (b, NUM_CLASSES), dtype=jnp.bfloat16)
    tgt4 = jax.random.randint(k_tgt, (b,), 0, NUM_CLASSES)
    loss4 = bbb_loss(out4, tgt4, kl, n_batches, b, sigma_prior, beta_val)
    jax.block_until_ready(loss4)
    ref4 = reference(out4, tgt4, kl, b, sigma_prior, beta_val)
    assert jnp.allclose(loss4, ref4, rtol=1e-3, atol=1e-3), (loss4, ref4)

    print("KERNEL_OK")
</pallas_src>

<mosaic_0001>
module attributes {stable_mosaic.version = 11 : i64} {
  func.func @kernel(%arg0: i32, %arg1: i32, %arg2: memref<8x10xf32, #tpu.memory_space<vmem>>, %arg3: memref<8x1xi32, #tpu.memory_space<vmem>>, %arg4: memref<8x10xf32, #tpu.memory_space<vmem>>) attributes {dimension_semantics = [#tpu.dimension_semantics<parallel>, #tpu.dimension_semantics<arbitrary>], iteration_bounds = array<i64: 1, 1>, scalar_prefetch = 0 : i64, scratch_operands = 0 : i64, tpu.core_type = #tpu.core_type<tc>, window_params = [{transform_indices = @transform_0, window_bounds = array<i64: 8, 10>}, {transform_indices = @transform_1, window_bounds = array<i64: 8, 1>}, {transform_indices = @transform_2, window_bounds = array<i64: 8, 10>}]} {
    %c0_i32 = arith.constant 0 : i32
    %0 = arith.cmpi eq, %arg1, %c0_i32 : i32
    %1 = arith.extui %0 : i1 to i32
    %c0_i32_0 = arith.constant 0 : i32
    %2 = arith.cmpi ne, %1, %c0_i32_0 : i32
    scf.if %2 {
      %cst_9 = arith.constant 0.000000e+00 : f32
      %17 = vector.broadcast %cst_9 : f32 to vector<8x10xf32>
      %c0_10 = arith.constant 0 : index
      %c0_11 = arith.constant 0 : index
      %18 = vector.load %arg4[%c0_10, %c0_11] : memref<8x10xf32, #tpu.memory_space<vmem>>, vector<8x10xf32>
      tpu.vector_store %arg4[%c0_10, %c0_11], %17 {strides = array<i32>} : memref<8x10xf32, #tpu.memory_space<vmem>>, vector<8x10xf32>,
    } else {
    }
    %c0 = arith.constant 0 : index
    %c0_1 = arith.constant 0 : index
    %3 = vector.load %arg2[%c0, %c0_1] : memref<8x10xf32, #tpu.memory_space<vmem>>, vector<8x10xf32>
    %4 = tpu.iota {dimensions = array<i32: 1>} : vector<8x10xi32>
    %c0_2 = arith.constant 0 : index
    %c0_3 = arith.constant 0 : index
    %5 = vector.load %arg3[%c0_2, %c0_3] : memref<8x1xi32, #tpu.memory_space<vmem>>, vector<8x1xi32>
    %6 = vector.broadcast %5 : vector<8x1xi32> to vector<8x10xi32>
    %7 = arith.cmpi eq, %4, %6 : vector<8x10xi32>
    %cst = arith.constant 1.000000e+00 : f32
    %8 = vector.broadcast %cst : f32 to vector<8x10xf32>
    %9 = arith.subf %3, %8 : vector<8x10xf32>
    %10 = arith.select %7, %9, %3 : vector<8x10xi1>, vector<8x10xf32>
    %11 = arith.mulf %10, %10 : vector<8x10xf32>
    %c0_4 = arith.constant 0 : index
    %c0_5 = arith.constant 0 : index
    %12 = vector.load %arg4[%c0_4, %c0_5] : memref<8x10xf32, #tpu.memory_space<vmem>>, vector<1x10xf32>
    %cst_6 = arith.constant dense<0.000000e+00> : vector<10xf32>
    %13 = vector.multi_reduction <add>, %11, %cst_6 [0] : vector<8x10xf32> to vector<10xf32>
    %14 = vector.shape_cast %13 : vector<10xf32> to vector<1x10xf32>
    %15 = arith.addf %12, %14 : vector<1x10xf32>
    %c0_7 = arith.constant 0 : index
    %c0_8 = arith.constant 0 : index
    %16 = vector.load %arg4[%c0_7, %c0_8] : memref<8x10xf32, #tpu.memory_space<vmem>>, vector<1x10xf32>
    tpu.vector_store %arg4[%c0_7, %c0_8], %15 {strides = array<i32>} : memref<8x10xf32, #tpu.memory_space<vmem>>, vector<1x10xf32>,
    return
  }
  func.func @transform_0(%arg0: i32, %arg1: i32) -> (i32, i32) {
    %c1_i32 = arith.constant 1 : i32
    %0 = arith.muli %arg0, %c1_i32 : i32
    %1 = arith.addi %0, %arg1 : i32
    %c0_i32 = arith.constant 0 : i32
    %c0_i32_0 = arith.constant 0 : i32
    return %1, %c0_i32 : i32, i32
  }
  func.func @transform_1(%arg0: i32, %arg1: i32) -> (i32, i32) {
    %c1_i32 = arith.constant 1 : i32
    %0 = arith.muli %arg0, %c1_i32 : i32
    %1 = arith.addi %0, %arg1 : i32
    %c0_i32 = arith.constant 0 : i32
    %c0_i32_0 = arith.constant 0 : i32
    return %1, %c0_i32 : i32, i32
  }
  func.func @transform_2(%arg0: i32, %arg1: i32) -> (i32, i32) {
    %c0_i32 = arith.constant 0 : i32
    %c0_i32_0 = arith.constant 0 : i32
    return %arg0, %c0_i32 : i32, i32
  }
}

</mosaic_0001>

<llo_original>
// kernel: tpu_custom_call.1
$region0: #{tpu_custom_call.1}
  #allocation0 [shape = 'u32[]', space=smem, size = 0x4, offset = 0x4, fixed_abs, tag = 'smem constant byte address 0x4 - core index']
  #allocation1 [shape = 'u32[144,128]{1,0:T(1,128)}', space=vmem, size = 0x12000, scoped, tag = 'internal scratch']
  %s0 = inlined_call_operand.vmem [shape: f32[8,10], index: 0, kind: input, shape index: {}]
  %s1 = inlined_call_operand.vmem [shape: s32[8,1], index: 1, kind: input, shape index: {}]
  %s2 = inlined_call_operand.hbm [shape: f32[8,10], index: 2, kind: output, shape index: {}]
  %s3 = sld [smem:[#allocation0]]
  $region22: #{tpu_custom_call.1} parent=0
    _
  %s5 = ssub.s32 1, %s3
  %s6 = scalar_select 0, %s5, %s3
  $region1: #{tpu_custom_call.1} parent=0
    #allocation2 [shape = 'u8[4096]{0}', space=vmem, size = 0x1000, scoped, tag = 'output window, operand 0, single buffered']
    #allocation3 [shape = 's32[1]{0}', space=sflag, size = 0x4, scoped, tag = 'scoped memory for tpu_custom_call.1']
    %7 = vsyncpa [#allocation3], 0
    // Predicated region
    $region2: #{tpu_custom_call.1} parent=1 // pred_check
      _
    $region3: #{tpu_custom_call.1} parent=1 // pred_check_branch
      %9 = sbr.rel (0) target = $region5
    $region4: #{tpu_custom_call.1} parent=1 // pred_region
      %s10 = sadd.s32 0, 0
      %p11 = scmp.lt.s32.totalorder %s10, 0
      %s12 = scalar_select %p11, %s10, 0
      %s13 = smul.addr %s12, 8
      %s14 = scalar_lea.vmem %s0, %s13
      %s15 = sadd.s32 0, 0
    $region5: #{tpu_custom_call.1} parent=1 // pred_fallthru
      _
    // Predicated region
    $region6: #{tpu_custom_call.1} parent=1 // pred_check
      _
    $region7: #{tpu_custom_call.1} parent=1 // pred_check_branch
      %17 = sbr.rel (0) target = $region9
    $region8: #{tpu_custom_call.1} parent=1 // pred_region
      %s18 = sadd.s32 0, 0
      %p19 = scmp.lt.s32.totalorder %s18, 0
      %s20 = scalar_select %p19, %s18, 0
      %s21 = smul.addr %s20, 8
      %s22 = scalar_lea.vmem %s1, %s21
      %s23 = sadd.s32 0, 0
    $region9: #{tpu_custom_call.1} parent=1 // pred_fallthru
      _
    %s24 = sadd.s32 0, 0
    %p25 = scmp.lt.s32.totalorder %s24, 0
    %s26 = scalar_select %p25, %s24, 0
    %s27 = smul.addr %s26, 8
    %s28 = scalar_lea.vmem %s0, %s27
    %s29 = sadd.s32 0, 0
    %p30 = scmp.lt.s32.totalorder %s29, 0
    %s31 = scalar_select %p30, %s29, 0
    %s32 = smul.addr %s31, 8
    %s33 = scalar_lea.vmem %s1, %s32
    %s34 = sadd.s32 0, 0
    %p35 = scmp.lt.s32.totalorder %s34, 0
    %s36 = scalar_select %p35, %s34, 0
    %s37 = smul.addr %s36, 8
    %s38 = scalar_lea.vmem %s0, %s37
    %s39 = sadd.s32 0, 0
    %s40 = sadd.s32 0, 0
    %p41 = scmp.lt.s32.totalorder %s40, 0
    %s42 = scalar_select %p41, %s40, 0
    %s43 = smul.addr %s42, 8
    %s44 = scalar_lea.vmem %s1, %s43
    %s45 = sadd.s32 0, 0
    %p46 = scmp.eq.s32.totalorder 0, 0
    // Predicated region
    $region10: #{tpu_custom_call.1} parent=1 // pred_check
      %p47 = pneg %p46
    $region11: #{tpu_custom_call.1} parent=1 // pred_check_branch
      %49 = sbr.rel (%p47) target = $region13
    $region12: #{tpu_custom_call.1} parent=1 // pred_region
      %vm50 = vcmask 80896
      %51 = vst.msk [vmem:[#allocation2] sm:$0xff] %vm50, 0.0
    $region13: #{tpu_custom_call.1} parent=1 // pred_fallthru
      _
    %v52 = vld [vmem:[%s38] sm:$0xff]
    %v53 = vlaneseq
    %v54 = vand.u32 %v53, 127
    %v55 = vld [vmem:[%s44] sm:$0xff]
    %56 = vset.pattern.permute.xlu0 0
    %57 = vperm.xlu0 %56, %v55
    %v58 = vpop.permute.xlu0 %57
    %vm59 = vcmp.eq.s32.totalorder %v54, %v58
    %v60 = vsub.f32 %v52, 1.0
    %v61 = vsel %vm59, %v60, %v52
    %v62 = vmul.f32 %v61, %v61
    %v63 = vld [vmem:[#allocation2] sm:$0x1]
    %vm64 = vcmask 80896
    %v65 = vsel %vm64, %v62, 0.0
    %v66 = vrot.slane %v65, 4
    %v67 = vadd.f32 %v65, %v66
    %v68 = vrot.slane %v67, 2
    %v69 = vadd.f32 %v67, %v68
    %v70 = vrot.slane %v69, 1
    %v71 = vadd.f32 %v69, %v70
    %v72 = vadd.f32 %v63, %v71
    %vm73 = vcmask 73728
    %74 = vst.msk [vmem:[#allocation2] sm:$0x1] %vm73, %v72
    // Predicated region
    $region14: #{tpu_custom_call.1} parent=1 // pred_check
      _
    $region15: #{tpu_custom_call.1} parent=1 // pred_check_branch
      %76 = sbr.rel (0) target = $region17
    $region16: #{tpu_custom_call.1} parent=1 // pred_region
      %s78 = ssub.s32 128, 128
      %79 = vsyncadd [#allocation3], %s78
      %s81 = sshll.u32 [#allocation2], 4
      %s82 = int_to_ptr.vmem [resolvable:$true] %s81
      %84 = dma.vmem_to_hbm [thread:$0]  %s82, 128, %s2, [#allocation3]
    $region17: #{tpu_custom_call.1} parent=1 // pred_fallthru
      _
    // Predicated region
    $region18: #{tpu_custom_call.1} parent=1 // pred_check
      _
    $region19: #{tpu_custom_call.1} parent=1 // pred_check_branch
      %86 = sbr.rel (0) target = $region21
    $region20: #{tpu_custom_call.1} parent=1 // pred_region
      %87 = dma.done [#allocation3], 128
    $region21: #{tpu_custom_call.1} parent=1 // pred_fallthru
      _
    %88 = vsyncpa [#allocation3], 1

</llo_original>
